<compile_context>
chip_gen: v7x
topology: tpu7x:2x2x1
jax: 0.10.0
libtpu: 0.0.40
codegen_flags: <defaults>
</compile_context>

<pallas_src>
import functools

import jax
import jax.numpy as jnp
from jax.experimental import pallas as pl
from jax.experimental.pallas import tpu as pltpu


# ----------------------------------------------------------------------------
# Pallas kernel for the wrapped callable f(x, w, b) = relu(x @ w + b)
# ----------------------------------------------------------------------------
def _dense_relu_kernel(x_ref, w_ref, b_ref, o_ref, acc_ref):
    k = pl.program_id(2)

    # Zero the accumulator at the start of each (i, j) output tile.
    @pl.when(k == 0)
    def _():
        acc_ref[...] = jnp.zeros_like(acc_ref)

    # bf16 x bf16 -> f32 accumulate on the MXU.
    acc_ref[...] += jnp.dot(
        x_ref[...], w_ref[...], preferred_element_type=jnp.float32
    )

    # Epilogue: bias + relu exactly once, on the final K step.
    @pl.when(k == pl.num_programs(2) - 1)
    def _():
        acc = acc_ref[...] + b_ref[...].astype(jnp.float32)  # b is (1, tn)
        o_ref[...] = jnp.maximum(acc, 0.0).astype(o_ref.dtype)


@functools.partial(jax.jit, static_argnames=("tm", "tn", "tk"))
def dense_relu(x, w, b, *, tm=128, tn=256, tk=256):
    """relu(x @ w + b) with a tiled Pallas TPU kernel.

    x: [M, K] float32 (cast to bf16 for the MXU), w: [K, N] float32 (cast to
    bf16), b: [1, N] float32.  Output: [M, N] float32.
    """
    M, K = x.shape
    K2, N = w.shape
    assert K == K2 and b.shape == (1, N)

    # Clamp tiles to the problem size, keep them (8, 128)-aligned.
    tm = min(tm, M)
    tn = min(tn, N)
    tk = min(tk, K)
    assert M % tm == 0 and N % tn == 0 and K % tk == 0, (
        "demo wrapper requires tile-divisible shapes"
    )
    # TODO(synk): add a padding path for non-tile-divisible M/N/K if needed.

    # bf16 inputs halve HBM/VMEM bytes and double MXU throughput on v6e/v7x;
    # accumulation stays f32 in the VMEM scratch.
    x_bf16 = x.astype(jnp.bfloat16)
    w_bf16 = w.astype(jnp.bfloat16)

    grid = (M // tm, N // tn, K // tk)

    cost = pl.CostEstimate(
        flops=2 * M * N * K,
        transcendentals=0,
        bytes_accessed=(M * K * 2) + (K * N * 2) + (N * 4) + (M * N * 4),
    )

    return pl.pallas_call(
        _dense_relu_kernel,
        out_shape=jax.ShapeDtypeStruct((M, N), jnp.float32),
        grid_spec=pltpu.PrefetchScalarGridSpec(
            num_scalar_prefetch=0,
            grid=grid,
            in_specs=[
                pl.BlockSpec((tm, tk), lambda i, j, k: (i, k)),  # x tile
                pl.BlockSpec((tk, tn), lambda i, j, k: (k, j)),  # w tile
                pl.BlockSpec((1, tn), lambda i, j, k: (0, j)),   # bias tile
            ],
            out_specs=pl.BlockSpec((tm, tn), lambda i, j, k: (i, j)),
            scratch_shapes=[pltpu.VMEM((tm, tn), jnp.float32)],
        ),
        compiler_params=pltpu.CompilerParams(
            dimension_semantics=("parallel", "parallel", "arbitrary"),
        ),
        cost_estimate=cost,
    )(x_bf16, w_bf16, b)


# ----------------------------------------------------------------------------
# JAX analogue of torch.export._wrapper_utils._WrapperModule
# ----------------------------------------------------------------------------
class WrapperModule:
    """Exact semantic analogue of _WrapperModule: forward(*a, **kw) = f(*a, **kw)."""

    def __init__(self, f):
        self.f = f

    def __call__(self, *args, **kwargs):
        return self.f(*args, **kwargs)


if __name__ == "__main__":
    # Deterministic parameters & inputs (synthetic, no checkpoint load).
    key = jax.random.PRNGKey(0)
    k_x, k_w, k_b = jax.random.split(key, 3)

    # Small but MXU/tile-aligned shapes so the tiled grid (2, 2, 2) is real
    # and all pl.when branches (init / accumulate / finalize) execute.
    M, K, N = 256, 512, 512
    x = jax.random.normal(k_x, (M, K), dtype=jnp.float32)
    w = jax.random.normal(k_w, (K, N), dtype=jnp.float32) * 0.05
    b = jax.random.normal(k_b, (1, N), dtype=jnp.float32) * 0.1

    # Wrap the Pallas-backed callable exactly like _WrapperModule wraps f.
    module = WrapperModule(dense_relu)

    out = module(x, w, b)
    jax.block_until_ready(out)

    # Reference of the wrapped f with matching bf16-input / f32-accumulate math.
    ref = jnp.maximum(
        jnp.dot(
            x.astype(jnp.bfloat16),
            w.astype(jnp.bfloat16),
            preferred_element_type=jnp.float32,
        )
        + b,
        0.0,
    )
    assert out.shape == (M, N)
    assert out.dtype == jnp.float32
    assert jnp.allclose(out, ref, atol=2e-2, rtol=2e-2)

    print("KERNEL_OK")
</pallas_src>

<mosaic_0001>
module attributes {stable_mosaic.version = 11 : i64} {
  func.func @_dense_relu_kernel(%arg0: i32, %arg1: i32, %arg2: i32, %arg3: memref<128x256xbf16, #tpu.memory_space<vmem>>, %arg4: memref<256x256xbf16, #tpu.memory_space<vmem>>, %arg5: memref<1x256xf32, #tpu.memory_space<vmem>>, %arg6: memref<128x256xf32, #tpu.memory_space<vmem>>, %arg7: memref<128x256xf32, #tpu.memory_space<vmem>>) attributes {dimension_semantics = [#tpu.dimension_semantics<parallel>, #tpu.dimension_semantics<parallel>, #tpu.dimension_semantics<arbitrary>], iteration_bounds = array<i64: 2, 2, 2>, scalar_prefetch = 0 : i64, scratch_operands = 1 : i64, tpu.core_type = #tpu.core_type<tc>, window_params = [{transform_indices = @transform_0, window_bounds = array<i64: 128, 256>}, {transform_indices = @transform_1, window_bounds = array<i64: 256, 256>}, {transform_indices = @transform_2, window_bounds = array<i64: 1, 256>}, {transform_indices = @transform_3, window_bounds = array<i64: 128, 256>}]} {
    %c0_i32 = arith.constant 0 : i32
    %0 = arith.cmpi eq, %arg2, %c0_i32 : i32
    %1 = arith.extui %0 : i1 to i32
    %c0_i32_0 = arith.constant 0 : i32
    %2 = arith.cmpi ne, %1, %c0_i32_0 : i32
    scf.if %2 {
      %cst_9 = arith.constant 0.000000e+00 : f32
      %12 = vector.broadcast %cst_9 : f32 to vector<128x256xf32>
      %c0_10 = arith.constant 0 : index
      %c0_11 = arith.constant 0 : index
      %13 = vector.load %arg7[%c0_10, %c0_11] : memref<128x256xf32, #tpu.memory_space<vmem>>, vector<128x256xf32>
      tpu.vector_store %arg7[%c0_10, %c0_11], %12 {strides = array<i32>} : memref<128x256xf32, #tpu.memory_space<vmem>>, vector<128x256xf32>,
    } else {
    }
    %c0 = arith.constant 0 : index
    %c0_1 = arith.constant 0 : index
    %3 = vector.load %arg7[%c0, %c0_1] : memref<128x256xf32, #tpu.memory_space<vmem>>, vector<128x256xf32>
    %c0_2 = arith.constant 0 : index
    %c0_3 = arith.constant 0 : index
    %4 = vector.load %arg3[%c0_2, %c0_3] : memref<128x256xbf16, #tpu.memory_space<vmem>>, vector<128x256xbf16>
    %c0_4 = arith.constant 0 : index
    %c0_5 = arith.constant 0 : index
    %5 = vector.load %arg4[%c0_4, %c0_5] : memref<256x256xbf16, #tpu.memory_space<vmem>>, vector<256x256xbf16>
    %cst = arith.constant dense<0.000000e+00> : vector<128x256xf32>
    %6 = tpu.matmul %4, %5, %cst {dimension_numbers = #tpu.dot_dimension_numbers<[1], [0], [0], [1], [0, 0, 1, 1], [], []>} : vector<128x256xbf16>, vector<256x256xbf16>, vector<128x256xf32> -> vector<128x256xf32>
    %7 = arith.addf %3, %6 : vector<128x256xf32>
    %c0_6 = arith.constant 0 : index
    %c0_7 = arith.constant 0 : index
    %8 = vector.load %arg7[%c0_6, %c0_7] : memref<128x256xf32, #tpu.memory_space<vmem>>, vector<128x256xf32>
    tpu.vector_store %arg7[%c0_6, %c0_7], %7 {strides = array<i32>} : memref<128x256xf32, #tpu.memory_space<vmem>>, vector<128x256xf32>,
    %c1_i32 = arith.constant 1 : i32
    %9 = arith.cmpi eq, %arg2, %c1_i32 : i32
    %10 = arith.extui %9 : i1 to i32
    %c0_i32_8 = arith.constant 0 : i32
    %11 = arith.cmpi ne, %10, %c0_i32_8 : i32
    scf.if %11 {
      %c0_9 = arith.constant 0 : index
      %c0_10 = arith.constant 0 : index
      %12 = vector.load %arg7[%c0_9, %c0_10] : memref<128x256xf32, #tpu.memory_space<vmem>>, vector<128x256xf32>
      %c0_11 = arith.constant 0 : index
      %c0_12 = arith.constant 0 : index
      %13 = vector.load %arg5[%c0_11, %c0_12] : memref<1x256xf32, #tpu.memory_space<vmem>>, vector<1x256xf32>
      %14 = vector.broadcast %13 : vector<1x256xf32> to vector<128x256xf32>
      %15 = arith.addf %12, %14 : vector<128x256xf32>
      %cst_13 = arith.constant 0.000000e+00 : f32
      %16 = vector.broadcast %cst_13 : f32 to vector<128x256xf32>
      %17 = arith.maximumf %15, %16 : vector<128x256xf32>
      %c0_14 = arith.constant 0 : index
      %c0_15 = arith.constant 0 : index
      %18 = vector.load %arg6[%c0_14, %c0_15] : memref<128x256xf32, #tpu.memory_space<vmem>>, vector<128x256xf32>
      tpu.vector_store %arg6[%c0_14, %c0_15], %17 {strides = array<i32>} : memref<128x256xf32, #tpu.memory_space<vmem>>, vector<128x256xf32>,
    } else {
    }
    return
  }
  func.func @transform_0(%arg0: i32, %arg1: i32, %arg2: i32) -> (i32, i32) {
    %c0_i32 = arith.constant 0 : i32
    return %arg0, %arg2 : i32, i32
  }
  func.func @transform_1(%arg0: i32, %arg1: i32, %arg2: i32) -> (i32, i32) {
    %c0_i32 = arith.constant 0 : i32
    return %arg2, %arg1 : i32, i32
  }
  func.func @transform_2(%arg0: i32, %arg1: i32, %arg2: i32) -> (i32, i32) {
    %c0_i32 = arith.constant 0 : i32
    %c0_i32_0 = arith.constant 0 : i32
    return %c0_i32, %arg1 : i32, i32
  }
  func.func @transform_3(%arg0: i32, %arg1: i32, %arg2: i32) -> (i32, i32) {
    %c0_i32 = arith.constant 0 : i32
    return %arg0, %arg1 : i32, i32
  }
}

</mosaic_0001>

<llo_original>
// kernel: dense_relu.1
$region0: #{dense_relu.1}
  #allocation0 [shape = 'u32[]', space=smem, size = 0x4, offset = 0x4, fixed_abs, tag = 'smem constant byte address 0x4 - core index']
  #allocation1 [shape = 'u32[144,128]{1,0:T(1,128)}', space=vmem, size = 0x12000, scoped, tag = 'internal scratch']
  #allocation2 [shape = 'f32[128,256]{1,0:T(8,128)}', space=vmem, size = 0x20000, scoped, tag = 'scratch operand']
  %s0 = inlined_call_operand.vmem [shape: bf16[256,512], index: 0, kind: input, shape index: {}]
  %s1 = inlined_call_operand.vmem [shape: bf16[512,512], index: 1, kind: input, shape index: {}]
  %s2 = inlined_call_operand.vmem [shape: f32[1,512], index: 2, kind: input, shape index: {}]
  %s3 = inlined_call_operand.hbm [shape: f32[256,512], index: 3, kind: output, shape index: {}]
  %s4 = sld [smem:[#allocation0]]
  $region129: #{dense_relu.1} parent=0
    _
  %s6 = ssub.s32 1, %s4
  %s7 = scalar_select 0, %s6, %s4
  $region1: #{dense_relu.1} parent=0
    #allocation3 [shape = 'u8[131072]{0}', space=vmem, size = 0x20000, scoped, tag = 'input window, operand 0']
    #allocation4 [shape = 'u8[262144]{0}', space=vmem, size = 0x40000, scoped, tag = 'input window, operand 1']
    #allocation5 [shape = 'u8[262144]{0}', space=vmem, size = 0x40000, scoped, tag = 'output window, operand 0']
    #allocation6 [shape = 's32[2]{0}', space=sflag, size = 0x8, scoped, tag = 'scoped memory for dense_relu.1']
    %8 = vsyncpa [#allocation6], 0
    %s9 = scalar_lea.sflag [#allocation6], 1
    %10 = vsyncpa %s9, 0
    loop: start=0, step=1, limit=10
    $region2: #{dense_relu.1} parent=1 // loop_pre_header
      _
    $region3: #{dense_relu.1} parent=1 // loop_header
      %s12 = sphi 0, %s16
      %p13 = scmp.ge.s32.totalorder %s12, 10
      %s19 = sphi 0, %s38
      %s20 = sphi 0, %s34
      %s21 = sphi 0, %s30
      %s22 = sphi 0, %s19
      %s23 = sphi 0, %s20
      %s24 = sphi 0, %s21
      %s25 = sphi 0, %s22
      %s26 = sphi 0, %s23
      %s27 = sphi 0, %s24
      %s43 = sphi 0, %s45
      %s46 = sphi 0, %s43
      %s47 = sphi 0, %s46
      %s63 = sphi 0, %s47
      %s71 = sphi 0, %s73
      %s74 = sphi 0, %s71
      %s75 = sphi 0, %s74
      %s91 = sphi 0, %s75
      %s97 = sphi 0, %s99
      %s100 = sphi 0, %s97
      %s101 = sphi 0, %s100
      %s117 = sphi 0, %s101
      %s125 = sphi 0, %s127
      %s128 = sphi 0, %s125
      %s129 = sphi 0, %s128
      %s145 = sphi 0, %s129
    $region4: #{dense_relu.1} parent=1 // loop_header_branch
      %15 = sbr.rel (%p13) target = $region8
    $region5: #{dense_relu.1} parent=1 // loop_body
      %s17 = ssub.s32 %s12, 1
      %s18 = ssub.s32 %s12, 2
      %s28 = sadd.s32 1, %s21
      %p29 = scmp.ge.s32.totalorder %s28, 2
      %s30 = scalar_select %p29, 0, %s28
      %s31 = sadd.s32 1, %s20
      %s32 = scalar_select %p29, %s31, %s20
      %p33 = scmp.ge.s32.totalorder %s32, 2
      %s34 = scalar_select %p33, 0, %s32
      %s35 = sadd.s32 1, %s19
      %s36 = scalar_select %p33, %s35, %s19
      %p37 = scmp.ge.s32.totalorder %s36, 2
      %s38 = scalar_select %p37, 0, %s36
      %s39 = ssub.s32 %s19, %s38
      %s40 = ssub.s32 %s21, %s30
      %s41 = sor.u32 %s39, %s40
      %p42 = scmp.eq.s32.totalorder %s41, 0
      %s44 = sadd.s32 %s43, 1
      %s45 = scalar_select %p42, %s43, %s44
      %p48 = pneg %p42
      %p49 = scmp.eq.s32.totalorder %s12, 7
      %p50 = por %p48, %p49
      %p51 = scmp.ne.s32.totalorder %s43, %s46
      %p52 = scmp.eq.s32.totalorder %s12, 0
      %p53 = por %p51, %p52
      %p54 = scmp.ne.s32.totalorder %s43, %s46
      %p55 = scmp.eq.s32.totalorder %s17, 7
      %p56 = por %p54, %p55
      %p57 = scmp.ne.s32.totalorder %s46, %s47
      %p58 = scmp.eq.s32.totalorder %s17, 0
      %p59 = por %p57, %p58
      %p60 = scmp.ne.s32.totalorder %s46, %s47
      %p61 = scmp.eq.s32.totalorder %s18, 7
      %p62 = por %p60, %p61
      %p64 = scmp.ne.s32.totalorder %s47, %s63
      %p65 = scmp.eq.s32.totalorder %s18, 0
      %p66 = por %p64, %p65
      %s67 = ssub.s32 %s21, %s30
      %s68 = ssub.s32 %s20, %s34
      %s69 = sor.u32 %s67, %s68
      %p70 = scmp.eq.s32.totalorder %s69, 0
      %s72 = sadd.s32 %s71, 1
      %s73 = scalar_select %p70, %s71, %s72
      %p76 = pneg %p70
      %p77 = scmp.eq.s32.totalorder %s12, 7
      %p78 = por %p76, %p77
      %p79 = scmp.ne.s32.totalorder %s71, %s74
      %p80 = scmp.eq.s32.totalorder %s12, 0
      %p81 = por %p79, %p80
      %p82 = scmp.ne.s32.totalorder %s71, %s74
      %p83 = scmp.eq.s32.totalorder %s17, 7
      %p84 = por %p82, %p83
      %p85 = scmp.ne.s32.totalorder %s74, %s75
      %p86 = scmp.eq.s32.totalorder %s17, 0
      %p87 = por %p85, %p86
      %p88 = scmp.ne.s32.totalorder %s74, %s75
      %p89 = scmp.eq.s32.totalorder %s18, 7
      %p90 = por %p88, %p89
      %p92 = scmp.ne.s32.totalorder %s75, %s91
      %p93 = scmp.eq.s32.totalorder %s18, 0
      %p94 = por %p92, %p93
      %s95 = ssub.s32 %s20, %s34
      %p96 = scmp.eq.s32.totalorder %s95, 0
      %s98 = sadd.s32 %s97, 1
      %s99 = scalar_select %p96, %s97, %s98
      %p102 = pneg %p96
      %p103 = scmp.eq.s32.totalorder %s12, 7
      %p104 = por %p102, %p103
      %p105 = scmp.ne.s32.totalorder %s97, %s100
      %p106 = scmp.eq.s32.totalorder %s12, 0
      %p107 = por %p105, %p106
      %p108 = scmp.ne.s32.totalorder %s97, %s100
      %p109 = scmp.eq.s32.totalorder %s17, 7
      %p110 = por %p108, %p109
      %p111 = scmp.ne.s32.totalorder %s100, %s101
      %p112 = scmp.eq.s32.totalorder %s17, 0
      %p113 = por %p111, %p112
      %p114 = scmp.ne.s32.totalorder %s100, %s101
      %p115 = scmp.eq.s32.totalorder %s18, 7
      %p116 = por %p114, %p115
      %p118 = scmp.ne.s32.totalorder %s101, %s117
      %p119 = scmp.eq.s32.totalorder %s18, 0
      %p120 = por %p118, %p119
      %s121 = ssub.s32 %s19, %s38
      %s122 = ssub.s32 %s20, %s34
      %s123 = sor.u32 %s121, %s122
      %p124 = scmp.eq.s32.totalorder %s123, 0
      %s126 = sadd.s32 %s125, 1
      %s127 = scalar_select %p124, %s125, %s126
      %p130 = pneg %p124
      %p131 = scmp.eq.s32.totalorder %s12, 7
      %p132 = por %p130, %p131
      %p133 = scmp.ne.s32.totalorder %s125, %s128
      %p134 = scmp.eq.s32.totalorder %s12, 0
      %p135 = por %p133, %p134
      %p136 = scmp.ne.s32.totalorder %s125, %s128
      %p137 = scmp.eq.s32.totalorder %s17, 7
      %p138 = por %p136, %p137
      %p139 = scmp.ne.s32.totalorder %s128, %s129
      %p140 = scmp.eq.s32.totalorder %s17, 0
      %p141 = por %p139, %p140
      %p142 = scmp.ne.s32.totalorder %s128, %s129
      %p143 = scmp.eq.s32.totalorder %s18, 7
      %p144 = por %p142, %p143
      %p146 = scmp.ne.s32.totalorder %s129, %s145
      %p147 = scmp.eq.s32.totalorder %s18, 0
      %p148 = por %p146, %p147
      %p149 = scmp.le.s32.totalorder 1, %s12
      %p150 = scmp.lt.s32.totalorder %s12, 9
      %p151 = pnand %p149, %p150
      %p152 = pneg %p151
      // Predicated region
      $region9: #{dense_relu.1} parent=5 // pred_check
        _
      $region10: #{dense_relu.1} parent=5 // pred_check_branch
        %154 = sbr.rel (%p151) target = $region12
      $region11: #{dense_relu.1} parent=5 // pred_region
        %s155 = ssub.s32 %s12, 1
      $region12: #{dense_relu.1} parent=5 // pred_fallthru
        _
      %p156 = scmp.lt.s32.totalorder %s12, 8
      // Predicated region
      $region13: #{dense_relu.1} parent=5 // pred_check
        %p157 = pneg %p156
      $region14: #{dense_relu.1} parent=5 // pred_check_branch
        %159 = sbr.rel (%p157) target = $region16
      $region15: #{dense_relu.1} parent=5 // pred_region
        // Predicated region
        $region17: #{dense_relu.1} parent=15 // pred_check
          %p160 = pneg %p53
        $region18: #{dense_relu.1} parent=15 // pred_check_branch
          %162 = sbr.rel (%p160) target = $region20
        $region19: #{dense_relu.1} parent=15 // pred_region
          %s163 = sand.u32 %s43, 1
          %s164 = sand.u32 %s43, 1
          %s165 = smul.addr %s164, 128
          %s166 = scalar_lea.vmem [#allocation3], %s165
          %s167 = smul.u32 16, %s19
          %s168 = smul.u32 2, %s21
          %s169 = smul.addr %s167, 4
          %s170 = sadd.s32 %s168, %s169
          %s171 = smul.addr %s170, 4
          %s172 = scalar_lea.vmem %s0, %s171
          // Predicated region
          $region21: #{dense_relu.1} parent=19 // pred_check
            _
          $region22: #{dense_relu.1} parent=19 // pred_check_branch
            %174 = sbr.rel (0) target = $region24
          $region23: #{dense_relu.1} parent=19 // pred_region
            // Predicated region
            $region25: #{dense_relu.1} parent=23 // pred_check
              _
            $region26: #{dense_relu.1} parent=23 // pred_check_branch
              %176 = sbr.rel (0) target = $region28
            $region27: #{dense_relu.1} parent=23 // pred_region
              // Predicated region
              $region40: #{dense_relu.1} parent=27 // pred_check
                _
              $region41: #{dense_relu.1} parent=27 // pred_check_branch
                %221 = sbr.rel (0) target = $region43
              $region42: #{dense_relu.1} parent=27 // pred_region
                loop: start=0, step=1, limit=1
                $region44: #{dense_relu.1} parent=42 // loop_pre_header
                  _
                $region45: #{dense_relu.1} parent=42 // loop_header
                  %s223 = sphi 0, %s227
                  %p224 = scmp.ge.s32.totalorder %s223, 1
                  %s228 = sphi %s172, %s172
                  %s229 = sphi %s166, %s166
                $region46: #{dense_relu.1} parent=42 // loop_header_branch
                  %226 = sbr.rel (%p224) target = $region50
                $region47: #{dense_relu.1} parent=42 // loop_body
                  %v230 = vld [vmem:[%s228] sm:$0xff]
                  %231 = vst [vmem:[%s229] sm:$0xff] %v230
                  %v232 = vld [vmem:[%s228 + $0x10] sm:$0xff]
                  %233 = vst [vmem:[%s229 + $0x8] sm:$0xff] %v232
                  %v234 = vld [vmem:[%s228 + $0x20] sm:$0xff]
                  %235 = vst [vmem:[%s229 + $0x10] sm:$0xff] %v234
                  %v236 = vld [vmem:[%s228 + $0x30] sm:$0xff]
                  %237 = vst [vmem:[%s229 + $0x18] sm:$0xff] %v236
                  %v238 = vld [vmem:[%s228 + $0x40] sm:$0xff]
                  %239 = vst [vmem:[%s229 + $0x20] sm:$0xff] %v238
                  %v240 = vld [vmem:[%s228 + $0x50] sm:$0xff]
                  %241 = vst [vmem:[%s229 + $0x28] sm:$0xff] %v240
                  %v242 = vld [vmem:[%s228 + $0x60] sm:$0xff]
                  %243 = vst [vmem:[%s229 + $0x30] sm:$0xff] %v242
                  %v244 = vld [vmem:[%s228 + $0x70] sm:$0xff]
                  %245 = vst [vmem:[%s229 + $0x38] sm:$0xff] %v244
                  %v246 = vld [vmem:[%s228 + $0x80] sm:$0xff]
                  %247 = vst [vmem:[%s229 + $0x40] sm:$0xff] %v246
                  %v248 = vld [vmem:[%s228 + $0x90] sm:$0xff]
                  %249 = vst [vmem:[%s229 + $0x48] sm:$0xff] %v248
                  %v250 = vld [vmem:[%s228 + $0xa0] sm:$0xff]
                  %251 = vst [vmem:[%s229 + $0x50] sm:$0xff] %v250
                  %v252 = vld [vmem:[%s228 + $0xb0] sm:$0xff]
                  %253 = vst [vmem:[%s229 + $0x58] sm:$0xff] %v252
                  %v254 = vld [vmem:[%s228 + $0xc0] sm:$0xff]
                  %255 = vst [vmem:[%s229 + $0x60] sm:$0xff] %v254
                  %v256 = vld [vmem:[%s228 + $0xd0] sm:$0xff]
                  %257 = vst [vmem:[%s229 + $0x68] sm:$0xff] %v256
                  %v258 = vld [vmem:[%s228 + $0xe0] sm:$0xff]
                  %259 = vst [vmem:[%s229 + $0x70] sm:$0xff] %v258
                  %v260 = vld [vmem:[%s228 + $0xf0] sm:$0xff]
                  %261 = vst [vmem:[%s229 + $0x78] sm:$0xff] %v260
                $region48: #{dense_relu.1} parent=42 // loop_footer
                  %s227 = sadd.s32 1, %s223
                $region49: #{dense_relu.1} parent=42 // loop_footer_branch
                  %222 = sbr.rel target = $region45
                $region50: #{dense_relu.1} parent=42 // loop_exit
                  _
              $region43: #{dense_relu.1} parent=27 // pred_fallthru
                _
              // Predicated region
              $region51: #{dense_relu.1} parent=27 // pred_check
                _
              $region52: #{dense_relu.1} parent=27 // pred_check_branch
                %263 = sbr.rel target = $region54
              $region53: #{dense_relu.1} parent=27 // pred_region
                _
              $region54: #{dense_relu.1} parent=27 // pred_fallthru
                _
            $region28: #{dense_relu.1} parent=23 // pred_fallthru
              _
            // Predicated region
            $region29: #{dense_relu.1} parent=23 // pred_check
              _
            $region30: #{dense_relu.1} parent=23 // pred_check_branch
              %178 = sbr.rel target = $region32
            $region31: #{dense_relu.1} parent=23 // pred_region
              loop: start=0, step=1, limit=1
              $region33: #{dense_relu.1} parent=31 // loop_pre_header
                _
              $region34: #{dense_relu.1} parent=31 // loop_header
                %s181 = sphi 0, %s185
                %p182 = scmp.ge.s32.totalorder %s181, 1
                %s186 = sphi %s172, %s172
                %s187 = sphi %s166, %s166
              $region35: #{dense_relu.1} parent=31 // loop_header_branch
                %184 = sbr.rel (%p182) target = $region39
              $region36: #{dense_relu.1} parent=31 // loop_body
                %v188 = vld [vmem:[%s186] sm:$0xff]
                %189 = vst [vmem:[%s187] sm:$0xff] %v188
                %v190 = vld [vmem:[%s186 + $0x10] sm:$0xff]
                %191 = vst [vmem:[%s187 + $0x8] sm:$0xff] %v190
                %v192 = vld [vmem:[%s186 + $0x20] sm:$0xff]
                %193 = vst [vmem:[%s187 + $0x10] sm:$0xff] %v192
                %v194 = vld [vmem:[%s186 + $0x30] sm:$0xff]
                %195 = vst [vmem:[%s187 + $0x18] sm:$0xff] %v194
                %v196 = vld [vmem:[%s186 + $0x40] sm:$0xff]
                %197 = vst [vmem:[%s187 + $0x20] sm:$0xff] %v196
                %v198 = vld [vmem:[%s186 + $0x50] sm:$0xff]
                %199 = vst [vmem:[%s187 + $0x28] sm:$0xff] %v198
                %v200 = vld [vmem:[%s186 + $0x60] sm:$0xff]
                %201 = vst [vmem:[%s187 + $0x30] sm:$0xff] %v200
                %v202 = vld [vmem:[%s186 + $0x70] sm:$0xff]
                %203 = vst [vmem:[%s187 + $0x38] sm:$0xff] %v202
                %v204 = vld [vmem:[%s186 + $0x80] sm:$0xff]
                %205 = vst [vmem:[%s187 + $0x40] sm:$0xff] %v204
                %v206 = vld [vmem:[%s186 + $0x90] sm:$0xff]
                %207 = vst [vmem:[%s187 + $0x48] sm:$0xff] %v206
                %v208 = vld [vmem:[%s186 + $0xa0] sm:$0xff]
                %209 = vst [vmem:[%s187 + $0x50] sm:$0xff] %v208
                %v210 = vld [vmem:[%s186 + $0xb0] sm:$0xff]
                %211 = vst [vmem:[%s187 + $0x58] sm:$0xff] %v210
                %v212 = vld [vmem:[%s186 + $0xc0] sm:$0xff]
                %213 = vst [vmem:[%s187 + $0x60] sm:$0xff] %v212
                %v214 = vld [vmem:[%s186 + $0xd0] sm:$0xff]
                %215 = vst [vmem:[%s187 + $0x68] sm:$0xff] %v214
                %v216 = vld [vmem:[%s186 + $0xe0] sm:$0xff]
                %217 = vst [vmem:[%s187 + $0x70] sm:$0xff] %v216
                %v218 = vld [vmem:[%s186 + $0xf0] sm:$0xff]
                %219 = vst [vmem:[%s187 + $0x78] sm:$0xff] %v218
              $region37: #{dense_relu.1} parent=31 // loop_footer
                %s185 = sadd.s32 1, %s181
              $region38: #{dense_relu.1} parent=31 // loop_footer_branch
                %180 = sbr.rel target = $region34
              $region39: #{dense_relu.1} parent=31 // loop_exit
                _
            $region32: #{dense_relu.1} parent=23 // pred_fallthru
              _
          $region24: #{dense_relu.1} parent=19 // pred_fallthru
            _
          %264 = vnop
        $region20: #{dense_relu.1} parent=15 // pred_fallthru
          _
        // Predicated region
        $region55: #{dense_relu.1} parent=15 // pred_check
          %p265 = pneg %p81
        $region56: #{dense_relu.1} parent=15 // pred_check_branch
          %267 = sbr.rel (%p265) target = $region58
        $region57: #{dense_relu.1} parent=15 // pred_region
          %s268 = sand.u32 %s71, 1
          %s269 = sand.u32 %s71, 1
          %s270 = smul.addr %s269, 256
          %s271 = scalar_lea.vmem [#allocation4], %s270
          %s272 = smul.u32 32, %s21
          %s273 = smul.u32 2, %s20
          %s274 = smul.addr %s272, 4
          %s275 = sadd.s32 %s273, %s274
          %s276 = smul.addr %s275, 4
          %s277 = scalar_lea.vmem %s1, %s276
          // Predicated region
          $region59: #{dense_relu.1} parent=57 // pred_check
            _
          $region60: #{dense_relu.1} parent=57 // pred_check_branch
            %279 = sbr.rel (0) target = $region62
          $region61: #{dense_relu.1} parent=57 // pred_region
            // Predicated region
            $region63: #{dense_relu.1} parent=61 // pred_check
              _
            $region64: #{dense_relu.1} parent=61 // pred_check_branch
              %281 = sbr.rel (0) target = $region66
            $region65: #{dense_relu.1} parent=61 // pred_region
              // Predicated region
              $region78: #{dense_relu.1} parent=65 // pred_check
                _
              $region79: #{dense_relu.1} parent=65 // pred_check_branch
                %358 = sbr.rel (0) target = $region81
              $region80: #{dense_relu.1} parent=65 // pred_region
                loop: start=0, step=1, limit=1
                $region82: #{dense_relu.1} parent=80 // loop_pre_header
                  _
                $region83: #{dense_relu.1} parent=80 // loop_header
                  %s360 = sphi 0, %s364
                  %p361 = scmp.ge.s32.totalorder %s360, 1
                  %s365 = sphi %s277, %s277
                  %s366 = sphi %s271, %s271
                $region84: #{dense_relu.1} parent=80 // loop_header_branch
                  %363 = sbr.rel (%p361) target = $region88
                $region85: #{dense_relu.1} parent=80 // loop_body
                  %v367 = vld [vmem:[%s365] sm:$0xff]
                  %368 = vst [vmem:[%s366] sm:$0xff] %v367
                  %v369 = vld [vmem:[%s365 + $0x10] sm:$0xff]
                  %370 = vst [vmem:[%s366 + $0x8] sm:$0xff] %v369
                  %v371 = vld [vmem:[%s365 + $0x20] sm:$0xff]
                  %372 = vst [vmem:[%s366 + $0x10] sm:$0xff] %v371
                  %v373 = vld [vmem:[%s365 + $0x30] sm:$0xff]
                  %374 = vst [vmem:[%s366 + $0x18] sm:$0xff] %v373
                  %v375 = vld [vmem:[%s365 + $0x40] sm:$0xff]
                  %376 = vst [vmem:[%s366 + $0x20] sm:$0xff] %v375
                  %v377 = vld [vmem:[%s365 + $0x50] sm:$0xff]
                  %378 = vst [vmem:[%s366 + $0x28] sm:$0xff] %v377
                  %v379 = vld [vmem:[%s365 + $0x60] sm:$0xff]
                  %380 = vst [vmem:[%s366 + $0x30] sm:$0xff] %v379
                  %v381 = vld [vmem:[%s365 + $0x70] sm:$0xff]
                  %382 = vst [vmem:[%s366 + $0x38] sm:$0xff] %v381
                  %v383 = vld [vmem:[%s365 + $0x80] sm:$0xff]
                  %384 = vst [vmem:[%s366 + $0x40] sm:$0xff] %v383
                  %v385 = vld [vmem:[%s365 + $0x90] sm:$0xff]
                  %386 = vst [vmem:[%s366 + $0x48] sm:$0xff] %v385
                  %v387 = vld [vmem:[%s365 + $0xa0] sm:$0xff]
                  %388 = vst [vmem:[%s366 + $0x50] sm:$0xff] %v387
                  %v389 = vld [vmem:[%s365 + $0xb0] sm:$0xff]
                  %390 = vst [vmem:[%s366 + $0x58] sm:$0xff] %v389
                  %v391 = vld [vmem:[%s365 + $0xc0] sm:$0xff]
                  %392 = vst [vmem:[%s366 + $0x60] sm:$0xff] %v391
                  %v393 = vld [vmem:[%s365 + $0xd0] sm:$0xff]
                  %394 = vst [vmem:[%s366 + $0x68] sm:$0xff] %v393
                  %v395 = vld [vmem:[%s365 + $0xe0] sm:$0xff]
                  %396 = vst [vmem:[%s366 + $0x70] sm:$0xff] %v395
                  %v397 = vld [vmem:[%s365 + $0xf0] sm:$0xff]
                  %398 = vst [vmem:[%s366 + $0x78] sm:$0xff] %v397
                  %v399 = vld [vmem:[%s365 + $0x100] sm:$0xff]
                  %400 = vst [vmem:[%s366 + $0x80] sm:$0xff] %v399
                  %v401 = vld [vmem:[%s365 + $0x110] sm:$0xff]
                  %402 = vst [vmem:[%s366 + $0x88] sm:$0xff] %v401
                  %v403 = vld [vmem:[%s365 + $0x120] sm:$0xff]
                  %404 = vst [vmem:[%s366 + $0x90] sm:$0xff] %v403
                  %v405 = vld [vmem:[%s365 + $0x130] sm:$0xff]
                  %406 = vst [vmem:[%s366 + $0x98] sm:$0xff] %v405
                  %v407 = vld [vmem:[%s365 + $0x140] sm:$0xff]
                  %408 = vst [vmem:[%s366 + $0xa0] sm:$0xff] %v407
                  %v409 = vld [vmem:[%s365 + $0x150] sm:$0xff]
                  %410 = vst [vmem:[%s366 + $0xa8] sm:$0xff] %v409
                  %v411 = vld [vmem:[%s365 + $0x160] sm:$0xff]
                  %412 = vst [vmem:[%s366 + $0xb0] sm:$0xff] %v411
                  %v413 = vld [vmem:[%s365 + $0x170] sm:$0xff]
                  %414 = vst [vmem:[%s366 + $0xb8] sm:$0xff] %v413
                  %v415 = vld [vmem:[%s365 + $0x180] sm:$0xff]
                  %416 = vst [vmem:[%s366 + $0xc0] sm:$0xff] %v415
                  %v417 = vld [vmem:[%s365 + $0x190] sm:$0xff]
                  %418 = vst [vmem:[%s366 + $0xc8] sm:$0xff] %v417
                  %v419 = vld [vmem:[%s365 + $0x1a0] sm:$0xff]
                  %420 = vst [vmem:[%s366 + $0xd0] sm:$0xff] %v419
                  %v421 = vld [vmem:[%s365 + $0x1b0] sm:$0xff]
                  %422 = vst [vmem:[%s366 + $0xd8] sm:$0xff] %v421
                  %v423 = vld [vmem:[%s365 + $0x1c0] sm:$0xff]
                  %424 = vst [vmem:[%s366 + $0xe0] sm:$0xff] %v423
                  %v425 = vld [vmem:[%s365 + $0x1d0] sm:$0xff]
                  %426 = vst [vmem:[%s366 + $0xe8] sm:$0xff] %v425
                  %v427 = vld [vmem:[%s365 + $0x1e0] sm:$0xff]
                  %428 = vst [vmem:[%s366 + $0xf0] sm:$0xff] %v427
                  %v429 = vld [vmem:[%s365 + $0x1f0] sm:$0xff]
                  %430 = vst [vmem:[%s366 + $0xf8] sm:$0xff] %v429
                $region86: #{dense_relu.1} parent=80 // loop_footer
                  %s364 = sadd.s32 1, %s360
                $region87: #{dense_relu.1} parent=80 // loop_footer_branch
                  %359 = sbr.rel target = $region83
                $region88: #{dense_relu.1} parent=80 // loop_exit
                  _
              $region81: #{dense_relu.1} parent=65 // pred_fallthru
                _
              // Predicated region
              $region89: #{dense_relu.1} parent=65 // pred_check
                _
              $region90: #{dense_relu.1} parent=65 // pred_check_branch
                %432 = sbr.rel target = $region92
              $region91: #{dense_relu.1} parent=65 // pred_region
                _
              $region92: #{dense_relu.1} parent=65 // pred_fallthru
                _
            $region66: #{dense_relu.1} parent=61 // pred_fallthru
              _
            // Predicated region
            $region67: #{dense_relu.1} parent=61 // pred_check
              _
            $region68: #{dense_relu.1} parent=61 // pred_check_branch
              %283 = sbr.rel target = $region70
            $region69: #{dense_relu.1} parent=61 // pred_region
              loop: start=0, step=1, limit=1
              $region71: #{dense_relu.1} parent=69 // loop_pre_header
                _
              $region72: #{dense_relu.1} parent=69 // loop_header
                %s286 = sphi 0, %s290
                %p287 = scmp.ge.s32.totalorder %s286, 1
                %s291 = sphi %s277, %s277
                %s292 = sphi %s271, %s271
              $region73: #{dense_relu.1} parent=69 // loop_header_branch
                %289 = sbr.rel (%p287) target = $region77
              $region74: #{dense_relu.1} parent=69 // loop_body
                %v293 = vld [vmem:[%s291] sm:$0xff]
                %294 = vst [vmem:[%s292] sm:$0xff] %v293
                %v295 = vld [vmem:[%s291 + $0x10] sm:$0xff]
                %296 = vst [vmem:[%s292 + $0x8] sm:$0xff] %v295
                %v297 = vld [vmem:[%s291 + $0x20] sm:$0xff]
                %298 = vst [vmem:[%s292 + $0x10] sm:$0xff] %v297
                %v299 = vld [vmem:[%s291 + $0x30] sm:$0xff]
                %300 = vst [vmem:[%s292 + $0x18] sm:$0xff] %v299
                %v301 = vld [vmem:[%s291 + $0x40] sm:$0xff]
                %302 = vst [vmem:[%s292 + $0x20] sm:$0xff] %v301
                %v303 = vld [vmem:[%s291 + $0x50] sm:$0xff]
                %304 = vst [vmem:[%s292 + $0x28] sm:$0xff] %v303
                %v305 = vld [vmem:[%s291 + $0x60] sm:$0xff]
                %306 = vst [vmem:[%s292 + $0x30] sm:$0xff] %v305
                %v307 = vld [vmem:[%s291 + $0x70] sm:$0xff]
                %308 = vst [vmem:[%s292 + $0x38] sm:$0xff] %v307
                %v309 = vld [vmem:[%s291 + $0x80] sm:$0xff]
                %310 = vst [vmem:[%s292 + $0x40] sm:$0xff] %v309
                %v311 = vld [vmem:[%s291 + $0x90] sm:$0xff]
                %312 = vst [vmem:[%s292 + $0x48] sm:$0xff] %v311
                %v313 = vld [vmem:[%s291 + $0xa0] sm:$0xff]
                %314 = vst [vmem:[%s292 + $0x50] sm:$0xff] %v313
                %v315 = vld [vmem:[%s291 + $0xb0] sm:$0xff]
                %316 = vst [vmem:[%s292 + $0x58] sm:$0xff] %v315
                %v317 = vld [vmem:[%s291 + $0xc0] sm:$0xff]
                %318 = vst [vmem:[%s292 + $0x60] sm:$0xff] %v317
                %v319 = vld [vmem:[%s291 + $0xd0] sm:$0xff]
                %320 = vst [vmem:[%s292 + $0x68] sm:$0xff] %v319
                %v321 = vld [vmem:[%s291 + $0xe0] sm:$0xff]
                %322 = vst [vmem:[%s292 + $0x70] sm:$0xff] %v321
                %v323 = vld [vmem:[%s291 + $0xf0] sm:$0xff]
                %324 = vst [vmem:[%s292 + $0x78] sm:$0xff] %v323
                %v325 = vld [vmem:[%s291 + $0x100] sm:$0xff]
                %326 = vst [vmem:[%s292 + $0x80] sm:$0xff] %v325
                %v327 = vld [vmem:[%s291 + $0x110] sm:$0xff]
                %328 = vst [vmem:[%s292 + $0x88] sm:$0xff] %v327
                %v329 = vld [vmem:[%s291 + $0x120] sm:$0xff]
                %330 = vst [vmem:[%s292 + $0x90] sm:$0xff] %v329
                %v331 = vld [vmem:[%s291 + $0x130] sm:$0xff]
                %332 = vst [vmem:[%s292 + $0x98] sm:$0xff] %v331
                %v333 = vld [vmem:[%s291 + $0x140] sm:$0xff]
                %334 = vst [vmem:[%s292 + $0xa0] sm:$0xff] %v333
                %v335 = vld [vmem:[%s291 + $0x150] sm:$0xff]
                %336 = vst [vmem:[%s292 + $0xa8] sm:$0xff] %v335
                %v337 = vld [vmem:[%s291 + $0x160] sm:$0xff]
                %338 = vst [vmem:[%s292 + $0xb0] sm:$0xff] %v337
                %v339 = vld [vmem:[%s291 + $0x170] sm:$0xff]
                %340 = vst [vmem:[%s292 + $0xb8] sm:$0xff] %v339
                %v341 = vld [vmem:[%s291 + $0x180] sm:$0xff]
                %342 = vst [vmem:[%s292 + $0xc0] sm:$0xff] %v341
                %v343 = vld [vmem:[%s291 + $0x190] sm:$0xff]
                %344 = vst [vmem:[%s292 + $0xc8] sm:$0xff] %v343
                %v345 = vld [vmem:[%s291 + $0x1a0] sm:$0xff]
                %346 = vst [vmem:[%s292 + $0xd0] sm:$0xff] %v345
                %v347 = vld [vmem:[%s291 + $0x1b0] sm:$0xff]
                %348 = vst [vmem:[%s292 + $0xd8] sm:$0xff] %v347
                %v349 = vld [vmem:[%s291 + $0x1c0] sm:$0xff]
                %350 = vst [vmem:[%s292 + $0xe0] sm:$0xff] %v349
                %v351 = vld [vmem:[%s291 + $0x1d0] sm:$0xff]
                %352 = vst [vmem:[%s292 + $0xe8] sm:$0xff] %v351
                %v353 = vld [vmem:[%s291 + $0x1e0] sm:$0xff]
                %354 = vst [vmem:[%s292 + $0xf0] sm:$0xff] %v353
                %v355 = vld [vmem:[%s291 + $0x1f0] sm:$0xff]
                %356 = vst [vmem:[%s292 + $0xf8] sm:$0xff] %v355
              $region75: #{dense_relu.1} parent=69 // loop_footer
                %s290 = sadd.s32 1, %s286
              $region76: #{dense_relu.1} parent=69 // loop_footer_branch
                %285 = sbr.rel target = $region72
              $region77: #{dense_relu.1} parent=69 // loop_exit
                _
            $region70: #{dense_relu.1} parent=61 // pred_fallthru
              _
          $region62: #{dense_relu.1} parent=57 // pred_fallthru
            _
          %433 = vnop
        $region58: #{dense_relu.1} parent=15 // pred_fallthru
          _
        // Predicated region
        $region93: #{dense_relu.1} parent=15 // pred_check
          %p434 = pneg %p107
        $region94: #{dense_relu.1} parent=15 // pred_check_branch
          %436 = sbr.rel (%p434) target = $region96
        $region95: #{dense_relu.1} parent=15 // pred_region
          %s437 = smul.u32 2, %s20
          %p438 = scmp.lt.s32.totalorder %s437, 3
          %s439 = scalar_select %p438, %s437, 3
          %s440 = scalar_lea.vmem %s2, %s439
          %s441 = smul.u32 2, %s20
        $region96: #{dense_relu.1} parent=15 // pred_fallthru
          _
      $region16: #{dense_relu.1} parent=5 // pred_fallthru
        _
      %p442 = scmp.le.s32.totalorder 1, %s12
      %p443 = scmp.lt.s32.totalorder %s12, 9
      %p444 = pnand %p442, %p443
      %p445 = pneg %p444
      // Predicated region
      $region97: #{dense_relu.1} parent=5 // pred_check
        _
      $region98: #{dense_relu.1} parent=5 // pred_check_branch
        %447 = sbr.rel (%p444) target = $region100
      $region99: #{dense_relu.1} parent=5 // pred_region
        %s448 = ssub.s32 %s12, 1
        %s449 = sand.u32 %s46, 1
        %s450 = sand.u32 %s46, 1
        %s451 = smul.addr %s450, 128
        %s452 = scalar_lea.vmem [#allocation3], %s451
        // Predicated region
        $region101: #{dense_relu.1} parent=99 // pred_check
          %p453 = pneg %p59
        $region102: #{dense_relu.1} parent=99 // pred_check_branch
          %455 = sbr.rel (%p453) target = $region104
        $region103: #{dense_relu.1} parent=99 // pred_region
          _
        $region104: #{dense_relu.1} parent=99 // pred_fallthru
          _
        %s456 = sand.u32 %s74, 1
        %s457 = sand.u32 %s74, 1
        %s458 = smul.addr %s457, 256
        %s459 = scalar_lea.vmem [#allocation4], %s458
        // Predicated region
        $region105: #{dense_relu.1} parent=99 // pred_check
          %p460 = pneg %p87
        $region106: #{dense_relu.1} parent=99 // pred_check_branch
          %462 = sbr.rel (%p460) target = $region108
        $region107: #{dense_relu.1} parent=99 // pred_region
          _
        $region108: #{dense_relu.1} parent=99 // pred_fallthru
          _
        %s463 = sand.u32 %s46, 1
        %s464 = sand.u32 %s46, 1
        %s465 = smul.addr %s464, 128
        %s466 = scalar_lea.vmem [#allocation3], %s465
        %p467 = pneg %p59
        %p468 = pneg %p56
        %s469 = sand.u32 %s74, 1
        %s470 = sand.u32 %s74, 1
        %s471 = smul.addr %s470, 256
        %s472 = scalar_lea.vmem [#allocation4], %s471
        %p473 = pneg %p87
        %p474 = pneg %p84
        %s475 = smul.u32 2, %s23
        %p476 = scmp.lt.s32.totalorder %s475, 3
        %s477 = scalar_select %p476, %s475, 3
        %s478 = scalar_lea.vmem %s2, %s477
        %p479 = pneg %p113
        %p480 = pneg %p110
        %p481 = pneg %p141
        %p482 = pneg %p138
        %s483 = sand.u32 %s128, 1
        %s484 = scalar_lea.sflag [#allocation6], %s483
        %s485 = sand.u32 %s128, 1
        %s486 = smul.addr %s485, 256
        %s487 = scalar_lea.vmem [#allocation5], %s486
        %s488 = smul.u32 16, %s22
        %s489 = smul.u32 2, %s24
        %s490 = smul.u32 32, %s24
        %s491 = smul.u32 2, %s23
        %s492 = smul.u32 2, %s23
        %p493 = scmp.lt.s32.totalorder %s492, 3
        %s494 = scalar_select %p493, %s492, 3
        %s495 = scalar_lea.vmem %s2, %s494
        %s496 = smul.u32 2, %s23
        %s497 = smul.u32 16, %s22
        %s498 = smul.u32 2, %s23
        %p499 = scmp.eq.s32.totalorder %s24, 0
        // Predicated region
        $region109: #{dense_relu.1} parent=99 // pred_check
          %p500 = pneg %p499
        $region110: #{dense_relu.1} parent=99 // pred_check_branch
          %502 = sbr.rel (%p500) target = $region112
        $region111: #{dense_relu.1} parent=99 // pred_region
          %503 = vst [vmem:[#allocation2] sm:$0xff] 0.0
          %504 = vst [vmem:[#allocation2 + $0x8] sm:$0xff] 0.0
          %505 = vst [vmem:[#allocation2 + $0x10] sm:$0xff] 0.0
          %506 = vst [vmem:[#allocation2 + $0x18] sm:$0xff] 0.0
          %507 = vst [vmem:[#allocation2 + $0x20] sm:$0xff] 0.0
          %508 = vst [vmem:[#allocation2 + $0x28] sm:$0xff] 0.0
          %509 = vst [vmem:[#allocation2 + $0x30] sm:$0xff] 0.0
          %510 = vst [vmem:[#allocation2 + $0x38] sm:$0xff] 0.0
          %511 = vst [vmem:[#allocation2 + $0x40] sm:$0xff] 0.0
          %512 = vst [vmem:[#allocation2 + $0x48] sm:$0xff] 0.0
          %513 = vst [vmem:[#allocation2 + $0x50] sm:$0xff] 0.0
          %514 = vst [vmem:[#allocation2 + $0x58] sm:$0xff] 0.0
          %515 = vst [vmem:[#allocation2 + $0x60] sm:$0xff] 0.0
          %516 = vst [vmem:[#allocation2 + $0x68] sm:$0xff] 0.0
          %517 = vst [vmem:[#allocation2 + $0x70] sm:$0xff] 0.0
          %518 = vst [vmem:[#allocation2 + $0x78] sm:$0xff] 0.0
          %519 = vst [vmem:[#allocation2 + $0x80] sm:$0xff] 0.0
          %520 = vst [vmem:[#allocation2 + $0x88] sm:$0xff] 0.0
          %521 = vst [vmem:[#allocation2 + $0x90] sm:$0xff] 0.0
          %522 = vst [vmem:[#allocation2 + $0x98] sm:$0xff] 0.0
          %523 = vst [vmem:[#allocation2 + $0xa0] sm:$0xff] 0.0
          %524 = vst [vmem:[#allocation2 + $0xa8] sm:$0xff] 0.0
          %525 = vst [vmem:[#allocation2 + $0xb0] sm:$0xff] 0.0
          %526 = vst [vmem:[#allocation2 + $0xb8] sm:$0xff] 0.0
          %527 = vst [vmem:[#allocation2 + $0xc0] sm:$0xff] 0.0
          %528 = vst [vmem:[#allocation2 + $0xc8] sm:$0xff] 0.0
          %529 = vst [vmem:[#allocation2 + $0xd0] sm:$0xff] 0.0
          %530 = vst [vmem:[#allocation2 + $0xd8] sm:$0xff] 0.0
          %531 = vst [vmem:[#allocation2 + $0xe0] sm:$0xff] 0.0
          %532 = vst [vmem:[#allocation2 + $0xe8] sm:$0xff] 0.0
          %533 = vst [vmem:[#allocation2 + $0xf0] sm:$0xff] 0.0
          %534 = vst [vmem:[#allocation2 + $0xf8] sm:$0xff] 0.0
        $region112: #{dense_relu.1} parent=99 // pred_fallthru
          _
        %v535 = vld [vmem:[#allocation2] sm:$0xff]
        %v536 = vld [vmem:[#allocation2 + $0x8] sm:$0xff]
        %v537 = vld [vmem:[#allocation2 + $0x10] sm:$0xff]
        %v538 = vld [vmem:[#allocation2 + $0x18] sm:$0xff]
        %v539 = vld [vmem:[#allocation2 + $0x20] sm:$0xff]
        %v540 = vld [vmem:[#allocation2 + $0x28] sm:$0xff]
        %v541 = vld [vmem:[#allocation2 + $0x30] sm:$0xff]
        %v542 = vld [vmem:[#allocation2 + $0x38] sm:$0xff]
        %v543 = vld [vmem:[#allocation2 + $0x40] sm:$0xff]
        %v544 = vld [vmem:[#allocation2 + $0x48] sm:$0xff]
        %v545 = vld [vmem:[#allocation2 + $0x50] sm:$0xff]
        %v546 = vld [vmem:[#allocation2 + $0x58] sm:$0xff]
        %v547 = vld [vmem:[#allocation2 + $0x60] sm:$0xff]
        %v548 = vld [vmem:[#allocation2 + $0x68] sm:$0xff]
        %v549 = vld [vmem:[#allocation2 + $0x70] sm:$0xff]
        %v550 = vld [vmem:[#allocation2 + $0x78] sm:$0xff]
        %v551 = vld [vmem:[#allocation2 + $0x80] sm:$0xff]
        %v552 = vld [vmem:[#allocation2 + $0x88] sm:$0xff]
        %v553 = vld [vmem:[#allocation2 + $0x90] sm:$0xff]
        %v554 = vld [vmem:[#allocation2 + $0x98] sm:$0xff]
        %v555 = vld [vmem:[#allocation2 + $0xa0] sm:$0xff]
        %v556 = vld [vmem:[#allocation2 + $0xa8] sm:$0xff]
        %v557 = vld [vmem:[#allocation2 + $0xb0] sm:$0xff]
        %v558 = vld [vmem:[#allocation2 + $0xb8] sm:$0xff]
        %v559 = vld [vmem:[#allocation2 + $0xc0] sm:$0xff]
        %v560 = vld [vmem:[#allocation2 + $0xc8] sm:$0xff]
        %v561 = vld [vmem:[#allocation2 + $0xd0] sm:$0xff]
        %v562 = vld [vmem:[#allocation2 + $0xd8] sm:$0xff]
        %v563 = vld [vmem:[#allocation2 + $0xe0] sm:$0xff]
        %v564 = vld [vmem:[#allocation2 + $0xe8] sm:$0xff]
        %v565 = vld [vmem:[#allocation2 + $0xf0] sm:$0xff]
        %v566 = vld [vmem:[#allocation2 + $0xf8] sm:$0xff]
        %v567 = vld [vmem:[%s452] sm:$0xff]
        %v568 = vld [vmem:[%s452 + $0x8] sm:$0xff]
        %v569 = vld [vmem:[%s452 + $0x10] sm:$0xff]
        %v570 = vld [vmem:[%s452 + $0x18] sm:$0xff]
        %v571 = vld [vmem:[%s452 + $0x20] sm:$0xff]
        %v572 = vld [vmem:[%s452 + $0x28] sm:$0xff]
        %v573 = vld [vmem:[%s452 + $0x30] sm:$0xff]
        %v574 = vld [vmem:[%s452 + $0x38] sm:$0xff]
        %v575 = vld [vmem:[%s452 + $0x40] sm:$0xff]
        %v576 = vld [vmem:[%s452 + $0x48] sm:$0xff]
        %v577 = vld [vmem:[%s452 + $0x50] sm:$0xff]
        %v578 = vld [vmem:[%s452 + $0x58] sm:$0xff]
        %v579 = vld [vmem:[%s452 + $0x60] sm:$0xff]
        %v580 = vld [vmem:[%s452 + $0x68] sm:$0xff]
        %v581 = vld [vmem:[%s452 + $0x70] sm:$0xff]
        %v582 = vld [vmem:[%s452 + $0x78] sm:$0xff]
        %v583 = vld [vmem:[%s459] sm:$0xff]
        %v584 = vld [vmem:[%s459 + $0x8] sm:$0xff]
        %v585 = vld [vmem:[%s459 + $0x10] sm:$0xff]
        %v586 = vld [vmem:[%s459 + $0x18] sm:$0xff]
        %v587 = vld [vmem:[%s459 + $0x20] sm:$0xff]
        %v588 = vld [vmem:[%s459 + $0x28] sm:$0xff]
        %v589 = vld [vmem:[%s459 + $0x30] sm:$0xff]
        %v590 = vld [vmem:[%s459 + $0x38] sm:$0xff]
        %v591 = vld [vmem:[%s459 + $0x40] sm:$0xff]
        %v592 = vld [vmem:[%s459 + $0x48] sm:$0xff]
        %v593 = vld [vmem:[%s459 + $0x50] sm:$0xff]
        %v594 = vld [vmem:[%s459 + $0x58] sm:$0xff]
        %v595 = vld [vmem:[%s459 + $0x60] sm:$0xff]
        %v596 = vld [vmem:[%s459 + $0x68] sm:$0xff]
        %v597 = vld [vmem:[%s459 + $0x70] sm:$0xff]
        %v598 = vld [vmem:[%s459 + $0x78] sm:$0xff]
        %v599 = vld [vmem:[%s459 + $0x80] sm:$0xff]
        %v600 = vld [vmem:[%s459 + $0x88] sm:$0xff]
        %v601 = vld [vmem:[%s459 + $0x90] sm:$0xff]
        %v602 = vld [vmem:[%s459 + $0x98] sm:$0xff]
        %v603 = vld [vmem:[%s459 + $0xa0] sm:$0xff]
        %v604 = vld [vmem:[%s459 + $0xa8] sm:$0xff]
        %v605 = vld [vmem:[%s459 + $0xb0] sm:$0xff]
        %v606 = vld [vmem:[%s459 + $0xb8] sm:$0xff]
        %v607 = vld [vmem:[%s459 + $0xc0] sm:$0xff]
        %v608 = vld [vmem:[%s459 + $0xc8] sm:$0xff]
        %v609 = vld [vmem:[%s459 + $0xd0] sm:$0xff]
        %v610 = vld [vmem:[%s459 + $0xd8] sm:$0xff]
        %v611 = vld [vmem:[%s459 + $0xe0] sm:$0xff]
        %v612 = vld [vmem:[%s459 + $0xe8] sm:$0xff]
        %v613 = vld [vmem:[%s459 + $0xf0] sm:$0xff]
        %v614 = vld [vmem:[%s459 + $0xf8] sm:$0xff]
        %v631 = vunpack.c.l.b16 %v567
        %v632 = vunpack.c.h.b16 %v567
        %v633 = vunpack.c.l.b16 %v568
        %v634 = vunpack.c.h.b16 %v568
        %v635 = vunpack.c.l.b16 %v569
        %v636 = vunpack.c.h.b16 %v569
        %v637 = vunpack.c.l.b16 %v570
        %v638 = vunpack.c.h.b16 %v570
        %v639 = vunpack.c.l.b16 %v571
        %v640 = vunpack.c.h.b16 %v571
        %v641 = vunpack.c.l.b16 %v572
        %v642 = vunpack.c.h.b16 %v572
        %v643 = vunpack.c.l.b16 %v573
        %v644 = vunpack.c.h.b16 %v573
        %v645 = vunpack.c.l.b16 %v574
        %v646 = vunpack.c.h.b16 %v574
        %v647 = vunpack.c.l.b16 %v575
        %v648 = vunpack.c.h.b16 %v575
        %v649 = vunpack.c.l.b16 %v576
        %v650 = vunpack.c.h.b16 %v576
        %v651 = vunpack.c.l.b16 %v577
        %v652 = vunpack.c.h.b16 %v577
        %v653 = vunpack.c.l.b16 %v578
        %v654 = vunpack.c.h.b16 %v578
        %v655 = vunpack.c.l.b16 %v579
        %v656 = vunpack.c.h.b16 %v579
        %v657 = vunpack.c.l.b16 %v580
        %v658 = vunpack.c.h.b16 %v580
        %v659 = vunpack.c.l.b16 %v581
        %v660 = vunpack.c.h.b16 %v581
        %v661 = vunpack.c.l.b16 %v582
        %v662 = vunpack.c.h.b16 %v582
        %v663 = vpack.c.b16 %v633, %v631
        %v664 = vpack.c.b16 %v634, %v632
        %v665 = vpack.c.b16 %v637, %v635
        %v666 = vpack.c.b16 %v638, %v636
        %v667 = vpack.c.b16 %v641, %v639
        %v668 = vpack.c.b16 %v642, %v640
        %v669 = vpack.c.b16 %v645, %v643
        %v670 = vpack.c.b16 %v646, %v644
        %v671 = vpack.c.b16 %v649, %v647
        %v672 = vpack.c.b16 %v650, %v648
        %v673 = vpack.c.b16 %v653, %v651
        %v674 = vpack.c.b16 %v654, %v652
        %v675 = vpack.c.b16 %v657, %v655
        %v676 = vpack.c.b16 %v658, %v656
        %v677 = vpack.c.b16 %v661, %v659
        %v678 = vpack.c.b16 %v662, %v660
        %v727 = vunpack.c.l.b16 %v583
        %v728 = vunpack.c.h.b16 %v583
        %v729 = vunpack.c.l.b16 %v584
        %v730 = vunpack.c.h.b16 %v584
        %v731 = vunpack.c.l.b16 %v585
        %v732 = vunpack.c.h.b16 %v585
        %v733 = vunpack.c.l.b16 %v586
        %v734 = vunpack.c.h.b16 %v586
        %v735 = vunpack.c.l.b16 %v587
        %v736 = vunpack.c.h.b16 %v587
        %v737 = vunpack.c.l.b16 %v588
        %v738 = vunpack.c.h.b16 %v588
        %v739 = vunpack.c.l.b16 %v589
        %v740 = vunpack.c.h.b16 %v589
        %v741 = vunpack.c.l.b16 %v590
        %v742 = vunpack.c.h.b16 %v590
        %v743 = vunpack.c.l.b16 %v591
        %v744 = vunpack.c.h.b16 %v591
        %v745 = vunpack.c.l.b16 %v592
        %v746 = vunpack.c.h.b16 %v592
        %v747 = vunpack.c.l.b16 %v593
        %v748 = vunpack.c.h.b16 %v593
        %v749 = vunpack.c.l.b16 %v594
        %v750 = vunpack.c.h.b16 %v594
        %v751 = vunpack.c.l.b16 %v595
        %v752 = vunpack.c.h.b16 %v595
        %v753 = vunpack.c.l.b16 %v596
        %v754 = vunpack.c.h.b16 %v596
        %v755 = vunpack.c.l.b16 %v597
        %v756 = vunpack.c.h.b16 %v597
        %v757 = vunpack.c.l.b16 %v598
        %v758 = vunpack.c.h.b16 %v598
        %v759 = vunpack.c.l.b16 %v599
        %v760 = vunpack.c.h.b16 %v599
        %v761 = vunpack.c.l.b16 %v600
        %v762 = vunpack.c.h.b16 %v600
        %v763 = vunpack.c.l.b16 %v601
        %v764 = vunpack.c.h.b16 %v601
        %v765 = vunpack.c.l.b16 %v602
        %v766 = vunpack.c.h.b16 %v602
        %v767 = vunpack.c.l.b16 %v603
        %v768 = vunpack.c.h.b16 %v603
        %v769 = vunpack.c.l.b16 %v604
        %v770 = vunpack.c.h.b16 %v604
        %v771 = vunpack.c.l.b16 %v605
        %v772 = vunpack.c.h.b16 %v605
        %v773 = vunpack.c.l.b16 %v606
        %v774 = vunpack.c.h.b16 %v606
        %v775 = vunpack.c.l.b16 %v607
        %v776 = vunpack.c.h.b16 %v607
        %v777 = vunpack.c.l.b16 %v608
        %v778 = vunpack.c.h.b16 %v608
        %v779 = vunpack.c.l.b16 %v609
        %v780 = vunpack.c.h.b16 %v609
        %v781 = vunpack.c.l.b16 %v610
        %v782 = vunpack.c.h.b16 %v610
        %v783 = vunpack.c.l.b16 %v611
        %v784 = vunpack.c.h.b16 %v611
        %v785 = vunpack.c.l.b16 %v612
        %v786 = vunpack.c.h.b16 %v612
        %v787 = vunpack.c.l.b16 %v613
        %v788 = vunpack.c.h.b16 %v613
        %v789 = vunpack.c.l.b16 %v614
        %v790 = vunpack.c.h.b16 %v614
        %v791 = vpack.c.b16 %v729, %v727
        %v792 = vpack.c.b16 %v730, %v728
        %v793 = vpack.c.b16 %v733, %v731
        %v794 = vpack.c.b16 %v734, %v732
        %v795 = vpack.c.b16 %v737, %v735
        %v796 = vpack.c.b16 %v738, %v736
        %v797 = vpack.c.b16 %v741, %v739
        %v798 = vpack.c.b16 %v742, %v740
        %v799 = vpack.c.b16 %v745, %v743
        %v800 = vpack.c.b16 %v746, %v744
        %v801 = vpack.c.b16 %v749, %v747
        %v802 = vpack.c.b16 %v750, %v748
        %v803 = vpack.c.b16 %v753, %v751
        %v804 = vpack.c.b16 %v754, %v752
        %v805 = vpack.c.b16 %v757, %v755
        %v806 = vpack.c.b16 %v758, %v756
        %v807 = vpack.c.b16 %v761, %v759
        %v808 = vpack.c.b16 %v762, %v760
        %v809 = vpack.c.b16 %v765, %v763
        %v810 = vpack.c.b16 %v766, %v764
        %v811 = vpack.c.b16 %v769, %v767
        %v812 = vpack.c.b16 %v770, %v768
        %v813 = vpack.c.b16 %v773, %v771
        %v814 = vpack.c.b16 %v774, %v772
        %v815 = vpack.c.b16 %v777, %v775
        %v816 = vpack.c.b16 %v778, %v776
        %v817 = vpack.c.b16 %v781, %v779
        %v818 = vpack.c.b16 %v782, %v780
        %v819 = vpack.c.b16 %v785, %v783
        %v820 = vpack.c.b16 %v786, %v784
        %v821 = vpack.c.b16 %v789, %v787
        %v822 = vpack.c.b16 %v790, %v788
        %855 = vmatprep.subr.bf16.mxu0 %v792
        %856 = vmatpush1.bf16.msra.mxu0 %v791
        %857 = vmatprep.subr.bf16.mxu0 %v794
        %858 = vmatpush1.bf16.msra.mxu0 %v793
        %859 = vmatprep.subr.bf16.mxu0 %v796
        %860 = vmatpush1.bf16.msra.mxu0 %v795
        %861 = vmatprep.subr.bf16.mxu0 %v798
        %862 = vmatpush1.bf16.msra.mxu0 %v797
        %863 = vmatprep.subr.bf16.mxu0 %v800
        %864 = vmatpush1.bf16.msra.mxu0 %v799
        %865 = vmatprep.subr.bf16.mxu0 %v802
        %866 = vmatpush1.bf16.msra.mxu0 %v801
        %867 = vmatprep.subr.bf16.mxu0 %v804
        %868 = vmatpush1.bf16.msra.mxu0 %v803
        %869 = vmatprep.subr.bf16.mxu0 %v806
        %870 = vmatpush1.bf16.msra.mxu0 %v805
        %871 = vmatprep.subr.bf16.mxu0 %v808
        %872 = vmatpush1.bf16.msra.mxu0 %v807
        %873 = vmatprep.subr.bf16.mxu0 %v810
        %874 = vmatpush1.bf16.msra.mxu0 %v809
        %875 = vmatprep.subr.bf16.mxu0 %v812
        %876 = vmatpush1.bf16.msra.mxu0 %v811
        %877 = vmatprep.subr.bf16.mxu0 %v814
        %878 = vmatpush1.bf16.msra.mxu0 %v813
        %879 = vmatprep.subr.bf16.mxu0 %v816
        %880 = vmatpush1.bf16.msra.mxu0 %v815
        %881 = vmatprep.subr.bf16.mxu0 %v818
        %882 = vmatpush1.bf16.msra.mxu0 %v817
        %883 = vmatprep.subr.bf16.mxu0 %v820
        %884 = vmatpush1.bf16.msra.mxu0 %v819
        %885 = vmatprep.subr.bf16.mxu0 %v822
        %886 = vmatpush1.bf16.msra.mxu0 %v821
        %887 = vmatprep.mubr.bf16.mxu0 %v664
        %888 = vmatmul.mubr.bf16.gmra.mrb[0].mxu0 %v663
        %v889 = vpop.f32.mrb[0].mxu0
        %v890 = vadd.f32 0.0, %v889
        %v891 = vpop.f32.mrb[0].mxu0
        %v892 = vadd.f32 0.0, %v891
        %v893 = vpop.f32.mrb[0].mxu0
        %v894 = vadd.f32 0.0, %v893
        %v895 = vpop.f32.mrb[0].mxu0
        %v896 = vadd.f32 0.0, %v895
        %897 = vmatprep.mubr.bf16.mxu0 %v666
        %898 = vmatmul.mubr.bf16.gmra.mrb[0].mxu0 %v665
        %v899 = vpop.f32.mrb[0].mxu0
        %v900 = vadd.f32 0.0, %v899
        %v901 = vpop.f32.mrb[0].mxu0
        %v902 = vadd.f32 0.0, %v901
        %v903 = vpop.f32.mrb[0].mxu0
        %v904 = vadd.f32 0.0, %v903
        %v905 = vpop.f32.mrb[0].mxu0
        %v906 = vadd.f32 0.0, %v905
        %907 = vmatprep.mubr.bf16.mxu0 %v668
        %908 = vmatmul.mubr.bf16.gmra.mrb[0].mxu0 %v667
        %v909 = vpop.f32.mrb[0].mxu0
        %v910 = vadd.f32 0.0, %v909
        %v911 = vpop.f32.mrb[0].mxu0
        %v912 = vadd.f32 0.0, %v911
        %v913 = vpop.f32.mrb[0].mxu0
        %v914 = vadd.f32 0.0, %v913
        %v915 = vpop.f32.mrb[0].mxu0
        %v916 = vadd.f32 0.0, %v915
        %917 = vmatprep.mubr.bf16.mxu0 %v670
        %918 = vmatmul.mubr.bf16.gmra.mrb[0].mxu0 %v669
        %v919 = vpop.f32.mrb[0].mxu0
        %v920 = vadd.f32 0.0, %v919
        %v921 = vpop.f32.mrb[0].mxu0
        %v922 = vadd.f32 0.0, %v921
        %v923 = vpop.f32.mrb[0].mxu0
        %v924 = vadd.f32 0.0, %v923
        %v925 = vpop.f32.mrb[0].mxu0
        %v926 = vadd.f32 0.0, %v925
        %927 = vmatprep.mubr.bf16.mxu0 %v672
        %928 = vmatmul.mubr.bf16.gmra.mrb[0].mxu0 %v671
        %v929 = vpop.f32.mrb[0].mxu0
        %v930 = vadd.f32 0.0, %v929
        %v931 = vpop.f32.mrb[0].mxu0
        %v932 = vadd.f32 0.0, %v931
        %v933 = vpop.f32.mrb[0].mxu0
        %v934 = vadd.f32 0.0, %v933
        %v935 = vpop.f32.mrb[0].mxu0
        %v936 = vadd.f32 0.0, %v935
        %937 = vmatprep.mubr.bf16.mxu0 %v674
        %938 = vmatmul.mubr.bf16.gmra.mrb[0].mxu0 %v673
        %v939 = vpop.f32.mrb[0].mxu0
        %v940 = vadd.f32 0.0, %v939
        %v941 = vpop.f32.mrb[0].mxu0
        %v942 = vadd.f32 0.0, %v941
        %v943 = vpop.f32.mrb[0].mxu0
        %v944 = vadd.f32 0.0, %v943
        %v945 = vpop.f32.mrb[0].mxu0
        %v946 = vadd.f32 0.0, %v945
        %947 = vmatprep.mubr.bf16.mxu0 %v676
        %948 = vmatmul.mubr.bf16.gmra.mrb[0].mxu0 %v675
        %v949 = vpop.f32.mrb[0].mxu0
        %v950 = vadd.f32 0.0, %v949
        %v951 = vpop.f32.mrb[0].mxu0
        %v952 = vadd.f32 0.0, %v951
        %v953 = vpop.f32.mrb[0].mxu0
        %v954 = vadd.f32 0.0, %v953
        %v955 = vpop.f32.mrb[0].mxu0
        %v956 = vadd.f32 0.0, %v955
        %957 = vmatprep.mubr.bf16.mxu0 %v678
        %958 = vmatmul.mubr.bf16.gmra.mrb[0].mxu0 %v677
        %v959 = vpop.f32.mrb[0].mxu0
        %v960 = vadd.f32 0.0, %v959
        %v961 = vpop.f32.mrb[0].mxu0
        %v962 = vadd.f32 0.0, %v961
        %v963 = vpop.f32.mrb[0].mxu0
        %v964 = vadd.f32 0.0, %v963
        %v965 = vpop.f32.mrb[0].mxu0
        %v966 = vadd.f32 0.0, %v965
        %967 = vdwg.mxu0
        %v968 = vadd.f32 %v535, %v890
        %v969 = vadd.f32 %v536, %v892
        %v970 = vadd.f32 %v537, %v894
        %v971 = vadd.f32 %v538, %v896
        %v972 = vadd.f32 %v539, %v900
        %v973 = vadd.f32 %v540, %v902
        %v974 = vadd.f32 %v541, %v904
        %v975 = vadd.f32 %v542, %v906
        %v976 = vadd.f32 %v543, %v910
        %v977 = vadd.f32 %v544, %v912
        %v978 = vadd.f32 %v545, %v914
        %v979 = vadd.f32 %v546, %v916
        %v980 = vadd.f32 %v547, %v920
        %v981 = vadd.f32 %v548, %v922
        %v982 = vadd.f32 %v549, %v924
        %v983 = vadd.f32 %v550, %v926
        %v984 = vadd.f32 %v551, %v930
        %v985 = vadd.f32 %v552, %v932
        %v986 = vadd.f32 %v553, %v934
        %v987 = vadd.f32 %v554, %v936
        %v988 = vadd.f32 %v555, %v940
        %v989 = vadd.f32 %v556, %v942
        %v990 = vadd.f32 %v557, %v944
        %v991 = vadd.f32 %v558, %v946
        %v992 = vadd.f32 %v559, %v950
        %v993 = vadd.f32 %v560, %v952
        %v994 = vadd.f32 %v561, %v954
        %v995 = vadd.f32 %v562, %v956
        %v996 = vadd.f32 %v563, %v960
        %v997 = vadd.f32 %v564, %v962
        %v998 = vadd.f32 %v565, %v964
        %v999 = vadd.f32 %v566, %v966
        %1000 = vst [vmem:[#allocation2] sm:$0xff] %v968
        %1001 = vst [vmem:[#allocation2 + $0x8] sm:$0xff] %v969
        %1002 = vst [vmem:[#allocation2 + $0x10] sm:$0xff] %v970
        %1003 = vst [vmem:[#allocation2 + $0x18] sm:$0xff] %v971
        %1004 = vst [vmem:[#allocation2 + $0x20] sm:$0xff] %v972
        %1005 = vst [vmem:[#allocation2 + $0x28] sm:$0xff] %v973
        %1006 = vst [vmem:[#allocation2 + $0x30] sm:$0xff] %v974
        %1007 = vst [vmem:[#allocation2 + $0x38] sm:$0xff] %v975
        %1008 = vst [vmem:[#allocation2 + $0x40] sm:$0xff] %v976
        %1009 = vst [vmem:[#allocation2 + $0x48] sm:$0xff] %v977
        %1010 = vst [vmem:[#allocation2 + $0x50] sm:$0xff] %v978
        %1011 = vst [vmem:[#allocation2 + $0x58] sm:$0xff] %v979
        %1012 = vst [vmem:[#allocation2 + $0x60] sm:$0xff] %v980
        %1013 = vst [vmem:[#allocation2 + $0x68] sm:$0xff] %v981
        %1014 = vst [vmem:[#allocation2 + $0x70] sm:$0xff] %v982
        %1015 = vst [vmem:[#allocation2 + $0x78] sm:$0xff] %v983
        %1016 = vst [vmem:[#allocation2 + $0x80] sm:$0xff] %v984
        %1017 = vst [vmem:[#allocation2 + $0x88] sm:$0xff] %v985
        %1018 = vst [vmem:[#allocation2 + $0x90] sm:$0xff] %v986
        %1019 = vst [vmem:[#allocation2 + $0x98] sm:$0xff] %v987
        %1020 = vst [vmem:[#allocation2 + $0xa0] sm:$0xff] %v988
        %1021 = vst [vmem:[#allocation2 + $0xa8] sm:$0xff] %v989
        %1022 = vst [vmem:[#allocation2 + $0xb0] sm:$0xff] %v990
        %1023 = vst [vmem:[#allocation2 + $0xb8] sm:$0xff] %v991
        %1024 = vst [vmem:[#allocation2 + $0xc0] sm:$0xff] %v992
        %1025 = vst [vmem:[#allocation2 + $0xc8] sm:$0xff] %v993
        %1026 = vst [vmem:[#allocation2 + $0xd0] sm:$0xff] %v994
        %1027 = vst [vmem:[#allocation2 + $0xd8] sm:$0xff] %v995
        %1028 = vst [vmem:[#allocation2 + $0xe0] sm:$0xff] %v996
        %1029 = vst [vmem:[#allocation2 + $0xe8] sm:$0xff] %v997
        %1030 = vst [vmem:[#allocation2 + $0xf0] sm:$0xff] %v998
        %1031 = vst [vmem:[#allocation2 + $0xf8] sm:$0xff] %v999
        %p1032 = scmp.eq.s32.totalorder %s24, 1
        // Predicated region
        $region113: #{dense_relu.1} parent=99 // pred_check
          %p1033 = pneg %p1032
        $region114: #{dense_relu.1} parent=99 // pred_check_branch
          %1035 = sbr.rel (%p1033) target = $region116
        $region115: #{dense_relu.1} parent=99 // pred_region
          %v1036 = vld [vmem:[#allocation2] sm:$0xff]
          %v1037 = vld [vmem:[#allocation2 + $0x8] sm:$0xff]
          %v1038 = vld [vmem:[#allocation2 + $0x10] sm:$0xff]
          %v1039 = vld [vmem:[#allocation2 + $0x18] sm:$0xff]
          %v1040 = vld [vmem:[#allocation2 + $0x20] sm:$0xff]
          %v1041 = vld [vmem:[#allocation2 + $0x28] sm:$0xff]
          %v1042 = vld [vmem:[#allocation2 + $0x30] sm:$0xff]
          %v1043 = vld [vmem:[#allocation2 + $0x38] sm:$0xff]
          %v1044 = vld [vmem:[#allocation2 + $0x40] sm:$0xff]
          %v1045 = vld [vmem:[#allocation2 + $0x48] sm:$0xff]
          %v1046 = vld [vmem:[#allocation2 + $0x50] sm:$0xff]
          %v1047 = vld [vmem:[#allocation2 + $0x58] sm:$0xff]
          %v1048 = vld [vmem:[#allocation2 + $0x60] sm:$0xff]
          %v1049 = vld [vmem:[#allocation2 + $0x68] sm:$0xff]
          %v1050 = vld [vmem:[#allocation2 + $0x70] sm:$0xff]
          %v1051 = vld [vmem:[#allocation2 + $0x78] sm:$0xff]
          %v1052 = vld [vmem:[#allocation2 + $0x80] sm:$0xff]
          %v1053 = vld [vmem:[#allocation2 + $0x88] sm:$0xff]
          %v1054 = vld [vmem:[#allocation2 + $0x90] sm:$0xff]
          %v1055 = vld [vmem:[#allocation2 + $0x98] sm:$0xff]
          %v1056 = vld [vmem:[#allocation2 + $0xa0] sm:$0xff]
          %v1057 = vld [vmem:[#allocation2 + $0xa8] sm:$0xff]
          %v1058 = vld [vmem:[#allocation2 + $0xb0] sm:$0xff]
          %v1059 = vld [vmem:[#allocation2 + $0xb8] sm:$0xff]
          %v1060 = vld [vmem:[#allocation2 + $0xc0] sm:$0xff]
          %v1061 = vld [vmem:[#allocation2 + $0xc8] sm:$0xff]
          %v1062 = vld [vmem:[#allocation2 + $0xd0] sm:$0xff]
          %v1063 = vld [vmem:[#allocation2 + $0xd8] sm:$0xff]
          %v1064 = vld [vmem:[#allocation2 + $0xe0] sm:$0xff]
          %v1065 = vld [vmem:[#allocation2 + $0xe8] sm:$0xff]
          %v1066 = vld [vmem:[#allocation2 + $0xf0] sm:$0xff]
          %v1067 = vld [vmem:[#allocation2 + $0xf8] sm:$0xff]
          %v1068 = vld [vmem:[%s495] sm:$0x3]
          %v1070 = vlaneseq
          %v1071 = vshrl.u32 %v1070, 7
          %v1072 = vsub.s32 0, %v1071
          %v1073 = vrot.slane %v1068, %v1072
          %v1074 = vlaneseq
          %v1075 = vshrl.u32 %v1074, 7
          %v1076 = vsub.s32 1, %v1075
          %v1077 = vrot.slane %v1068, %v1076
          %v1080 = vadd.f32 %v1036, %v1073
          %v1081 = vadd.f32 %v1037, %v1077
          %v1082 = vadd.f32 %v1038, %v1073
          %v1083 = vadd.f32 %v1039, %v1077
          %v1084 = vadd.f32 %v1040, %v1073
          %v1085 = vadd.f32 %v1041, %v1077
          %v1086 = vadd.f32 %v1042, %v1073
          %v1087 = vadd.f32 %v1043, %v1077
          %v1088 = vadd.f32 %v1044, %v1073
          %v1089 = vadd.f32 %v1045, %v1077
          %v1090 = vadd.f32 %v1046, %v1073
          %v1091 = vadd.f32 %v1047, %v1077
          %v1092 = vadd.f32 %v1048, %v1073
          %v1093 = vadd.f32 %v1049, %v1077
          %v1094 = vadd.f32 %v1050, %v1073
          %v1095 = vadd.f32 %v1051, %v1077
          %v1096 = vadd.f32 %v1052, %v1073
          %v1097 = vadd.f32 %v1053, %v1077
          %v1098 = vadd.f32 %v1054, %v1073
          %v1099 = vadd.f32 %v1055, %v1077
          %v1100 = vadd.f32 %v1056, %v1073
          %v1101 = vadd.f32 %v1057, %v1077
          %v1102 = vadd.f32 %v1058, %v1073
          %v1103 = vadd.f32 %v1059, %v1077
          %v1104 = vadd.f32 %v1060, %v1073
          %v1105 = vadd.f32 %v1061, %v1077
          %v1106 = vadd.f32 %v1062, %v1073
          %v1107 = vadd.f32 %v1063, %v1077
          %v1108 = vadd.f32 %v1064, %v1073
          %v1109 = vadd.f32 %v1065, %v1077
          %v1110 = vadd.f32 %v1066, %v1073
          %v1111 = vadd.f32 %v1067, %v1077
          %v1112 = vmax.f32 %v1080, 0.0
          %v1113 = vmax.f32 %v1081, 0.0
          %v1114 = vmax.f32 %v1082, 0.0
          %v1115 = vmax.f32 %v1083, 0.0
          %v1116 = vmax.f32 %v1084, 0.0
          %v1117 = vmax.f32 %v1085, 0.0
          %v1118 = vmax.f32 %v1086, 0.0
          %v1119 = vmax.f32 %v1087, 0.0
          %v1120 = vmax.f32 %v1088, 0.0
          %v1121 = vmax.f32 %v1089, 0.0
          %v1122 = vmax.f32 %v1090, 0.0
          %v1123 = vmax.f32 %v1091, 0.0
          %v1124 = vmax.f32 %v1092, 0.0
          %v1125 = vmax.f32 %v1093, 0.0
          %v1126 = vmax.f32 %v1094, 0.0
          %v1127 = vmax.f32 %v1095, 0.0
          %v1128 = vmax.f32 %v1096, 0.0
          %v1129 = vmax.f32 %v1097, 0.0
          %v1130 = vmax.f32 %v1098, 0.0
          %v1131 = vmax.f32 %v1099, 0.0
          %v1132 = vmax.f32 %v1100, 0.0
          %v1133 = vmax.f32 %v1101, 0.0
          %v1134 = vmax.f32 %v1102, 0.0
          %v1135 = vmax.f32 %v1103, 0.0
          %v1136 = vmax.f32 %v1104, 0.0
          %v1137 = vmax.f32 %v1105, 0.0
          %v1138 = vmax.f32 %v1106, 0.0
          %v1139 = vmax.f32 %v1107, 0.0
          %v1140 = vmax.f32 %v1108, 0.0
          %v1141 = vmax.f32 %v1109, 0.0
          %v1142 = vmax.f32 %v1110, 0.0
          %v1143 = vmax.f32 %v1111, 0.0
          %1144 = vst [vmem:[%s487] sm:$0xff] %v1112
          %1145 = vst [vmem:[%s487 + $0x8] sm:$0xff] %v1113
          %1146 = vst [vmem:[%s487 + $0x10] sm:$0xff] %v1114
          %1147 = vst [vmem:[%s487 + $0x18] sm:$0xff] %v1115
          %1148 = vst [vmem:[%s487 + $0x20] sm:$0xff] %v1116
          %1149 = vst [vmem:[%s487 + $0x28] sm:$0xff] %v1117
          %1150 = vst [vmem:[%s487 + $0x30] sm:$0xff] %v1118
          %1151 = vst [vmem:[%s487 + $0x38] sm:$0xff] %v1119
          %1152 = vst [vmem:[%s487 + $0x40] sm:$0xff] %v1120
          %1153 = vst [vmem:[%s487 + $0x48] sm:$0xff] %v1121
          %1154 = vst [vmem:[%s487 + $0x50] sm:$0xff] %v1122
          %1155 = vst [vmem:[%s487 + $0x58] sm:$0xff] %v1123
          %1156 = vst [vmem:[%s487 + $0x60] sm:$0xff] %v1124
          %1157 = vst [vmem:[%s487 + $0x68] sm:$0xff] %v1125
          %1158 = vst [vmem:[%s487 + $0x70] sm:$0xff] %v1126
          %1159 = vst [vmem:[%s487 + $0x78] sm:$0xff] %v1127
          %1160 = vst [vmem:[%s487 + $0x80] sm:$0xff] %v1128
          %1161 = vst [vmem:[%s487 + $0x88] sm:$0xff] %v1129
          %1162 = vst [vmem:[%s487 + $0x90] sm:$0xff] %v1130
          %1163 = vst [vmem:[%s487 + $0x98] sm:$0xff] %v1131
          %1164 = vst [vmem:[%s487 + $0xa0] sm:$0xff] %v1132
          %1165 = vst [vmem:[%s487 + $0xa8] sm:$0xff] %v1133
          %1166 = vst [vmem:[%s487 + $0xb0] sm:$0xff] %v1134
          %1167 = vst [vmem:[%s487 + $0xb8] sm:$0xff] %v1135
          %1168 = vst [vmem:[%s487 + $0xc0] sm:$0xff] %v1136
          %1169 = vst [vmem:[%s487 + $0xc8] sm:$0xff] %v1137
          %1170 = vst [vmem:[%s487 + $0xd0] sm:$0xff] %v1138
          %1171 = vst [vmem:[%s487 + $0xd8] sm:$0xff] %v1139
          %1172 = vst [vmem:[%s487 + $0xe0] sm:$0xff] %v1140
          %1173 = vst [vmem:[%s487 + $0xe8] sm:$0xff] %v1141
          %1174 = vst [vmem:[%s487 + $0xf0] sm:$0xff] %v1142
          %1175 = vst [vmem:[%s487 + $0xf8] sm:$0xff] %v1143
        $region116: #{dense_relu.1} parent=99 // pred_fallthru
          _
        %s1176 = sand.u32 %s128, 1
        %s1177 = scalar_lea.sflag [#allocation6], %s1176
        %s1178 = sand.u32 %s128, 1
        %s1179 = smul.addr %s1178, 256
        %s1180 = scalar_lea.vmem [#allocation5], %s1179
        // Predicated region
        $region117: #{dense_relu.1} parent=99 // pred_check
          %p1181 = pneg %p138
        $region118: #{dense_relu.1} parent=99 // pred_check_branch
          %1183 = sbr.rel (%p1181) target = $region120
        $region119: #{dense_relu.1} parent=99 // pred_region
          %s1184 = smul.u32 16, %s22
          %s1185 = smul.u32 2, %s23
          %s1187 = ssub.s32 4096, 4096
          %1188 = vsyncadd %s1177, %s1187
          %s1189 = smul.addr %s1184, 4
          %s1190 = sadd.s32 %s1185, %s1189
          %s1191 = smul.addr %s1190, 128
          %s1192 = scalar_lea.hbm %s3, %s1191
          %s1193 = sshll.u32 %s1180, 4
          %s1194 = int_to_ptr.vmem [resolvable:$true] %s1193
          %1199 = dma.vmem_to_hbm [thread:$0]  %s1194, 4096, %s1192, %s1177, 256, 512, 16
        $region120: #{dense_relu.1} parent=99 // pred_fallthru
          _
      $region100: #{dense_relu.1} parent=5 // pred_fallthru
        _
      %p1200 = scmp.le.s32.totalorder 2, %s12
      // Predicated region
      $region121: #{dense_relu.1} parent=5 // pred_check
        %p1201 = pneg %p1200
      $region122: #{dense_relu.1} parent=5 // pred_check_branch
        %1203 = sbr.rel (%p1201) target = $region124
      $region123: #{dense_relu.1} parent=5 // pred_region
        %s1204 = ssub.s32 %s12, 2
        // Predicated region
        $region125: #{dense_relu.1} parent=123 // pred_check
          %p1205 = pneg %p144
        $region126: #{dense_relu.1} parent=123 // pred_check_branch
          %1207 = sbr.rel (%p1205) target = $region128
        $region127: #{dense_relu.1} parent=123 // pred_region
          %s1208 = sand.u32 %s129, 1
          %s1209 = scalar_lea.sflag [#allocation6], %s1208
          %s1210 = sand.u32 %s129, 1
          %s1211 = smul.addr %s1210, 256
          %s1212 = scalar_lea.vmem [#allocation5], %s1211
          %1213 = dma.done %s1209, 4096
        $region128: #{dense_relu.1} parent=123 // pred_fallthru
          _
      $region124: #{dense_relu.1} parent=5 // pred_fallthru
        _
    $region6: #{dense_relu.1} parent=1 // loop_footer
      %s16 = sadd.s32 1, %s12
    $region7: #{dense_relu.1} parent=1 // loop_footer_branch
      %11 = sbr.rel target = $region3
    $region8: #{dense_relu.1} parent=1 // loop_exit
      _
    %1214 = vsyncpa [#allocation6], 1
    %s1215 = scalar_lea.sflag [#allocation6], 1
    %1216 = vsyncpa %s1215, 1

</llo_original>
